<compile_context>
chip_gen: v6e
topology: v6e:2x2x1
jax: 0.10.0
libtpu: 0.0.40
codegen_flags: <defaults>
</compile_context>

<pallas_src>
import jax
import jax.numpy as jnp
import numpy as np
from jax import lax
from jax.experimental import pallas as pl
from jax.experimental.pallas import tpu as pltpu

KH = KW = 24          # conv kernel size
STRIDE = 2
OH = OW = 3           # conv output spatial size for 28x28 input
IN_H = IN_W = 28
N_FEAT = IN_H * IN_W  # 784 flattened input features
K_PAD = 896           # 7*128, >= 785 (784 pixels + 1 bias column)
BIAS_COL = N_FEAT     # index of the constant-1.0 column in the padded input
N_TAPS = OH * OW      # 9 conv output positions (fc1 input features)
N_PAD = 128           # lane-dense width for the conv-output / fc stage
FC_BIAS_TAP = N_TAPS  # column 9 carries constant 1 through ReLU -> fc bias
MAX_B_TILE = 1024     # keeps double-buffered tiles well under 32 MiB scoped VMEM (v7x-safe)


def convnet_kernel(x_ref, weff_ref, fcw_ref, o_ref):
    """Fused im2col-matmul conv + ReLU + fc1 (biases folded into the weights).

    x_ref   : (B_TILE, 896) f32 VMEM  flattened+padded images, col 784 == 1.0
    weff_ref: (896, 128)    f32 VMEM  im2col conv weights (+ conv bias, fc-bias carrier)
    fcw_ref : (128, 128)    f32 VMEM  fc1 weights in column 0 (+ fc bias at row 9)
    o_ref   : (B_TILE, 128) f32 VMEM  column 0 = network output
    """
    conv = jnp.dot(x_ref[...], weff_ref[...], preferred_element_type=jnp.float32)
    conv = jnp.maximum(conv, 0.0)          # ReLU (conv bias already folded in)
    # dropout1(p=0.05) is identity in inference mode.
    # TODO(synk): training-mode dropout (random mask) not implemented.
    o_ref[...] = jnp.dot(conv, fcw_ref[...], preferred_element_type=jnp.float32)


def _build_weights(conv_w, conv_b, fc_w, fc_b):
    """Build padded effective weights. conv_w: (24,24), fc_w: (9,)."""
    weff = jnp.zeros((K_PAD, N_PAD), jnp.float32)
    kh = np.arange(KH)[:, None]
    kw = np.arange(KW)[None, :]
    w_flat = conv_w.reshape(-1)
    for oh in range(OH):
        for ow in range(OW):
            j = oh * OW + ow                                  # PyTorch flatten order
            rows = ((oh * STRIDE + kh) * IN_W + (ow * STRIDE + kw)).reshape(-1)
            weff = weff.at[rows, j].set(w_flat)
    # conv bias: fed by the constant-1.0 input column for every real tap.
    weff = weff.at[BIAS_COL, :N_TAPS].set(conv_b[0])
    # constant-1 carrier that survives ReLU and picks up the fc bias.
    weff = weff.at[BIAS_COL, FC_BIAS_TAP].set(1.0)

    fcw = jnp.zeros((N_PAD, N_PAD), jnp.float32)
    fcw = fcw.at[:N_TAPS, 0].set(fc_w)
    fcw = fcw.at[FC_BIAS_TAP, 0].set(fc_b[0])
    return weff, fcw


def convnet_forward(x_nchw, conv_w, conv_b, fc_w, fc_b):
    """x_nchw: (B, 1, 28, 28) f32 -> (B, 1) f32."""
    B = x_nchw.shape[0]
    x_flat = x_nchw.reshape(B, N_FEAT).astype(jnp.float32)        # (B, 784)
    ones = jnp.ones((B, 1), jnp.float32)
    x_ext = jnp.concatenate([x_flat, ones], axis=1)               # (B, 785)

    b_tile = min(MAX_B_TILE, ((B + 7) // 8) * 8)                  # multiple of 8
    b_pad = ((B + b_tile - 1) // b_tile) * b_tile
    x_pad = jnp.pad(x_ext, ((0, b_pad - B), (0, K_PAD - (N_FEAT + 1))))  # (B_pad, 896)

    weff, fcw = _build_weights(conv_w, conv_b, fc_w, fc_b)

    grid = (b_pad // b_tile,)
    cost = pl.CostEstimate(
        flops=2 * b_pad * K_PAD * N_PAD + 2 * b_pad * N_PAD * N_PAD,
        transcendentals=0,
        bytes_accessed=4 * (b_pad * K_PAD + K_PAD * N_PAD
                            + N_PAD * N_PAD + b_pad * N_PAD),
    )

    out = pl.pallas_call(
        convnet_kernel,
        out_shape=jax.ShapeDtypeStruct((b_pad, N_PAD), jnp.float32),
        grid=grid,
        in_specs=[
            pl.BlockSpec((b_tile, K_PAD), lambda b: (b, 0)),      # batch-tiled input
            pl.BlockSpec((K_PAD, N_PAD), lambda b: (0, 0)),       # replicated W_eff
            pl.BlockSpec((N_PAD, N_PAD), lambda b: (0, 0)),       # replicated fc matrix
        ],
        out_specs=pl.BlockSpec((b_tile, N_PAD), lambda b: (b, 0)),
        compiler_params=pltpu.CompilerParams(
            dimension_semantics=("parallel",)),
        cost_estimate=cost,
    )(x_pad, weff, fcw)

    return out[:B, :1]                                            # (B, 1)


def reference_forward(x_nchw, conv_w, conv_b, fc_w, fc_b):
    """Pure-JAX reference matching the PyTorch forward (eval mode)."""
    w4 = conv_w.reshape(1, 1, KH, KW)                             # OIHW
    conv = lax.conv_general_dilated(
        x_nchw, w4, window_strides=(STRIDE, STRIDE), padding="VALID",
        dimension_numbers=("NCHW", "OIHW", "NCHW"))
    conv = conv + conv_b[0]
    conv = jnp.maximum(conv, 0.0)
    flat = conv.reshape(conv.shape[0], -1)                        # (B, 9)
    return flat @ fc_w[:, None] + fc_b[0]                         # (B, 1)


if __name__ == "__main__":
    key = jax.random.PRNGKey(0)
    k_x, k_cw, k_cb, k_fw, k_fb = jax.random.split(key, 5)

    B = 2
    x = jax.random.normal(k_x, (B, 1, IN_H, IN_W), dtype=jnp.float32)

    # Deterministic parameter init (shapes from the module __init__).
    conv_w = 0.05 * jax.random.normal(k_cw, (KH, KW), dtype=jnp.float32)   # Conv2d(1,1,24)
    conv_b = 0.01 * jax.random.normal(k_cb, (1,), dtype=jnp.float32)
    fc_w = 0.3 * jax.random.normal(k_fw, (N_TAPS,), dtype=jnp.float32)     # Linear(9,1)
    fc_b = 0.01 * jax.random.normal(k_fb, (1,), dtype=jnp.float32)

    out = convnet_forward(x, conv_w, conv_b, fc_w, fc_b)
    out = jax.block_until_ready(out)

    ref = reference_forward(x, conv_w, conv_b, fc_w, fc_b)
    assert out.shape == (B, 1), out.shape
    assert jnp.allclose(out, ref, atol=1e-3, rtol=1e-3), (out, ref)

    print("KERNEL_OK")
</pallas_src>

<mosaic_0001>
module attributes {stable_mosaic.version = 11 : i64} {
  func.func @convnet_kernel(%arg0: i32, %arg1: memref<8x896xf32, #tpu.memory_space<vmem>>, %arg2: memref<896x128xf32, #tpu.memory_space<vmem>>, %arg3: memref<128x128xf32, #tpu.memory_space<vmem>>, %arg4: memref<8x128xf32, #tpu.memory_space<vmem>>) attributes {dimension_semantics = [#tpu.dimension_semantics<parallel>], iteration_bounds = array<i64: 1>, scalar_prefetch = 0 : i64, scratch_operands = 0 : i64, tpu.core_type = #tpu.core_type<tc>, window_params = [{transform_indices = @transform_0, window_bounds = array<i64: 8, 896>}, {pipeline_mode = #tpu.pipeline_mode<synchronous>, transform_indices = @transform_1, window_bounds = array<i64: 896, 128>}, {pipeline_mode = #tpu.pipeline_mode<synchronous>, transform_indices = @transform_2, window_bounds = array<i64: 128, 128>}, {transform_indices = @transform_3, window_bounds = array<i64: 8, 128>}]} {
    %c0 = arith.constant 0 : index
    %c0_0 = arith.constant 0 : index
    %0 = vector.load %arg1[%c0, %c0_0] : memref<8x896xf32, #tpu.memory_space<vmem>>, vector<8x896xf32>
    %c0_1 = arith.constant 0 : index
    %c0_2 = arith.constant 0 : index
    %1 = vector.load %arg2[%c0_1, %c0_2] : memref<896x128xf32, #tpu.memory_space<vmem>>, vector<896x128xf32>
    %cst = arith.constant dense<0.000000e+00> : vector<8x128xf32>
    %2 = tpu.matmul %0, %1, %cst {dimension_numbers = #tpu.dot_dimension_numbers<[1], [0], [0], [1], [0, 0, 1, 1], [], []>} : vector<8x896xf32>, vector<896x128xf32>, vector<8x128xf32> -> vector<8x128xf32>
    %cst_3 = arith.constant 0.000000e+00 : f32
    %3 = vector.broadcast %cst_3 : f32 to vector<8x128xf32>
    %4 = arith.maximumf %2, %3 : vector<8x128xf32>
    %c0_4 = arith.constant 0 : index
    %c0_5 = arith.constant 0 : index
    %5 = vector.load %arg3[%c0_4, %c0_5] : memref<128x128xf32, #tpu.memory_space<vmem>>, vector<128x128xf32>
    %cst_6 = arith.constant dense<0.000000e+00> : vector<8x128xf32>
    %6 = tpu.matmul %4, %5, %cst_6 {dimension_numbers = #tpu.dot_dimension_numbers<[1], [0], [0], [1], [0, 0, 1, 1], [], []>} : vector<8x128xf32>, vector<128x128xf32>, vector<8x128xf32> -> vector<8x128xf32>
    %c0_7 = arith.constant 0 : index
    %c0_8 = arith.constant 0 : index
    %7 = vector.load %arg4[%c0_7, %c0_8] : memref<8x128xf32, #tpu.memory_space<vmem>>, vector<8x128xf32>
    tpu.vector_store %arg4[%c0_7, %c0_8], %6 {strides = array<i32>} : memref<8x128xf32, #tpu.memory_space<vmem>>, vector<8x128xf32>,
    return
  }
  func.func @transform_0(%arg0: i32) -> (i32, i32) {
    %c0_i32 = arith.constant 0 : i32
    %c0_i32_0 = arith.constant 0 : i32
    return %arg0, %c0_i32 : i32, i32
  }
  func.func @transform_1(%arg0: i32) -> (i32, i32) {
    %c0_i32 = arith.constant 0 : i32
    %c0_i32_0 = arith.constant 0 : i32
    %c0_i32_1 = arith.constant 0 : i32
    return %c0_i32, %c0_i32_0 : i32, i32
  }
  func.func @transform_2(%arg0: i32) -> (i32, i32) {
    %c0_i32 = arith.constant 0 : i32
    %c0_i32_0 = arith.constant 0 : i32
    %c0_i32_1 = arith.constant 0 : i32
    return %c0_i32, %c0_i32_0 : i32, i32
  }
  func.func @transform_3(%arg0: i32) -> (i32, i32) {
    %c0_i32 = arith.constant 0 : i32
    %c0_i32_0 = arith.constant 0 : i32
    return %arg0, %c0_i32 : i32, i32
  }
}

</mosaic_0001>

<llo_original>
// kernel: tpu_custom_call.1
$region0: #{tpu_custom_call.1}
  #allocation0 [shape = 'u32[]', space=smem, size = 0x4, offset = 0x4, fixed_abs, tag = 'smem constant byte address 0x4 - core index']
  #allocation1 [shape = 'u32[144,128]{1,0:T(1,128)}', space=vmem, size = 0x12000, scoped, tag = 'internal scratch']
  %s0 = inlined_call_operand.hbm [shape: f32[8,896], index: 0, kind: input, shape index: {}]
  %s1 = inlined_call_operand.hbm [shape: f32[896,128], index: 1, kind: input, shape index: {}]
  %s2 = inlined_call_operand.hbm [shape: f32[128,128], index: 2, kind: input, shape index: {}]
  %s3 = inlined_call_operand.hbm [shape: f32[8,128], index: 3, kind: output, shape index: {}]
  %s4 = sld [smem:[#allocation0]]
  $region34: #{tpu_custom_call.1} parent=0
    _
  %s6 = ssub.s32 1, %s4
  %s7 = scalar_select 0, %s6, %s4
  $region1: #{tpu_custom_call.1} parent=0
    #allocation2 [shape = 'u8[28672]{0}', space=vmem, size = 0x7000, scoped, tag = 'input window, operand 0, single buffered']
    #allocation3 [shape = 's32[1]{0}', space=sflag, size = 0x4, scoped, tag = 'scoped memory for tpu_custom_call.1']
    #allocation4 [shape = 's32[1]{0}', space=sflag, size = 0x4, scoped, tag = 'scoped memory for tpu_custom_call.1']
    #allocation5 [shape = 'u8[458752]{0}', space=vmem, size = 0x70000, scoped, tag = 'input window, operand 1, single buffered']
    #allocation6 [shape = 's32[1]{0}', space=sflag, size = 0x4, scoped, tag = 'scoped memory for tpu_custom_call.1']
    #allocation7 [shape = 'u8[65536]{0}', space=vmem, size = 0x10000, scoped, tag = 'input window, operand 2, single buffered']
    #allocation8 [shape = 'u8[4096]{0}', space=vmem, size = 0x1000, scoped, tag = 'output window, operand 0, single buffered']
    %8 = vsyncpa [#allocation3], 0
    %9 = vsyncpa [#allocation6], 0
    %10 = vsyncpa [#allocation4], 0
    // Predicated region
    $region2: #{tpu_custom_call.1} parent=1 // pred_check
      _
    $region3: #{tpu_custom_call.1} parent=1 // pred_check_branch
      %12 = sbr.rel (0) target = $region5
    $region4: #{tpu_custom_call.1} parent=1 // pred_region
      %s14 = ssub.s32 896, 896
      %15 = vsyncadd [#allocation3], %s14
      %s17 = sshll.u32 [#allocation2], 4
      %s18 = int_to_ptr.vmem [resolvable:$true] %s17
      %20 = dma.hbm_to_vmem [thread:$0]  %s0, 896, %s18, [#allocation3]
    $region5: #{tpu_custom_call.1} parent=1 // pred_fallthru
      _
    // Predicated region
    $region6: #{tpu_custom_call.1} parent=1 // pred_check
      _
    $region7: #{tpu_custom_call.1} parent=1 // pred_check_branch
      %22 = sbr.rel (0) target = $region9
    $region8: #{tpu_custom_call.1} parent=1 // pred_region
      %s24 = ssub.s32 14336, 14336
      %25 = vsyncadd [#allocation6], %s24
      %s26 = sshll.u32 [#allocation5], 4
      %s27 = int_to_ptr.vmem [resolvable:$true] %s26
      %32 = dma.hbm_to_vmem [thread:$0]  %s1, 14336, %s27, [#allocation6], 128, 128, 8
    $region9: #{tpu_custom_call.1} parent=1 // pred_fallthru
      _
    // Predicated region
    $region10: #{tpu_custom_call.1} parent=1 // pred_check
      _
    $region11: #{tpu_custom_call.1} parent=1 // pred_check_branch
      %34 = sbr.rel (0) target = $region13
    $region12: #{tpu_custom_call.1} parent=1 // pred_region
      %s36 = ssub.s32 2048, 2048
      %37 = vsyncadd [#allocation6], %s36
      %s38 = sshll.u32 [#allocation7], 4
      %s39 = int_to_ptr.vmem [resolvable:$true] %s38
      %44 = dma.hbm_to_vmem [thread:$0]  %s2, 2048, %s39, [#allocation6], 128, 128, 8
    $region13: #{tpu_custom_call.1} parent=1 // pred_fallthru
      _
    // Predicated region
    $region14: #{tpu_custom_call.1} parent=1 // pred_check
      _
    $region15: #{tpu_custom_call.1} parent=1 // pred_check_branch
      %46 = sbr.rel (0) target = $region17
    $region16: #{tpu_custom_call.1} parent=1 // pred_region
      %47 = dma.done [#allocation3], 896
    $region17: #{tpu_custom_call.1} parent=1 // pred_fallthru
      _
    // Predicated region
    $region18: #{tpu_custom_call.1} parent=1 // pred_check
      _
    $region19: #{tpu_custom_call.1} parent=1 // pred_check_branch
      %49 = sbr.rel (0) target = $region21
    $region20: #{tpu_custom_call.1} parent=1 // pred_region
      %50 = dma.done [#allocation6], 14336
    $region21: #{tpu_custom_call.1} parent=1 // pred_fallthru
      _
    // Predicated region
    $region22: #{tpu_custom_call.1} parent=1 // pred_check
      _
    $region23: #{tpu_custom_call.1} parent=1 // pred_check_branch
      %52 = sbr.rel (0) target = $region25
    $region24: #{tpu_custom_call.1} parent=1 // pred_region
      %53 = dma.done [#allocation6], 2048
    $region25: #{tpu_custom_call.1} parent=1 // pred_fallthru
      _
    %v54 = vld [vmem:[#allocation2] sm:$0xff]
    %v55 = vld [vmem:[#allocation2 + $0x8] sm:$0xff]
    %v56 = vld [vmem:[#allocation2 + $0x10] sm:$0xff]
    %v57 = vld [vmem:[#allocation2 + $0x18] sm:$0xff]
    %v58 = vld [vmem:[#allocation2 + $0x20] sm:$0xff]
    %v59 = vld [vmem:[#allocation2 + $0x28] sm:$0xff]
    %v60 = vld [vmem:[#allocation2 + $0x30] sm:$0xff]
    %v61 = vld [vmem:[#allocation5] sm:$0xff]
    %v62 = vld [vmem:[#allocation5 + $0x8] sm:$0xff]
    %v63 = vld [vmem:[#allocation5 + $0x10] sm:$0xff]
    %v64 = vld [vmem:[#allocation5 + $0x18] sm:$0xff]
    %v65 = vld [vmem:[#allocation5 + $0x20] sm:$0xff]
    %v66 = vld [vmem:[#allocation5 + $0x28] sm:$0xff]
    %v67 = vld [vmem:[#allocation5 + $0x30] sm:$0xff]
    %v68 = vld [vmem:[#allocation5 + $0x38] sm:$0xff]
    %v69 = vld [vmem:[#allocation5 + $0x40] sm:$0xff]
    %v70 = vld [vmem:[#allocation5 + $0x48] sm:$0xff]
    %v71 = vld [vmem:[#allocation5 + $0x50] sm:$0xff]
    %v72 = vld [vmem:[#allocation5 + $0x58] sm:$0xff]
    %v73 = vld [vmem:[#allocation5 + $0x60] sm:$0xff]
    %v74 = vld [vmem:[#allocation5 + $0x68] sm:$0xff]
    %v75 = vld [vmem:[#allocation5 + $0x70] sm:$0xff]
    %v76 = vld [vmem:[#allocation5 + $0x78] sm:$0xff]
    %v77 = vld [vmem:[#allocation5 + $0x80] sm:$0xff]
    %v78 = vld [vmem:[#allocation5 + $0x88] sm:$0xff]
    %v79 = vld [vmem:[#allocation5 + $0x90] sm:$0xff]
    %v80 = vld [vmem:[#allocation5 + $0x98] sm:$0xff]
    %v81 = vld [vmem:[#allocation5 + $0xa0] sm:$0xff]
    %v82 = vld [vmem:[#allocation5 + $0xa8] sm:$0xff]
    %v83 = vld [vmem:[#allocation5 + $0xb0] sm:$0xff]
    %v84 = vld [vmem:[#allocation5 + $0xb8] sm:$0xff]
    %v85 = vld [vmem:[#allocation5 + $0xc0] sm:$0xff]
    %v86 = vld [vmem:[#allocation5 + $0xc8] sm:$0xff]
    %v87 = vld [vmem:[#allocation5 + $0xd0] sm:$0xff]
    %v88 = vld [vmem:[#allocation5 + $0xd8] sm:$0xff]
    %v89 = vld [vmem:[#allocation5 + $0xe0] sm:$0xff]
    %v90 = vld [vmem:[#allocation5 + $0xe8] sm:$0xff]
    %v91 = vld [vmem:[#allocation5 + $0xf0] sm:$0xff]
    %v92 = vld [vmem:[#allocation5 + $0xf8] sm:$0xff]
    %v93 = vld [vmem:[#allocation5 + $0x100] sm:$0xff]
    %v94 = vld [vmem:[#allocation5 + $0x108] sm:$0xff]
    %v95 = vld [vmem:[#allocation5 + $0x110] sm:$0xff]
    %v96 = vld [vmem:[#allocation5 + $0x118] sm:$0xff]
    %v97 = vld [vmem:[#allocation5 + $0x120] sm:$0xff]
    %v98 = vld [vmem:[#allocation5 + $0x128] sm:$0xff]
    %v99 = vld [vmem:[#allocation5 + $0x130] sm:$0xff]
    %v100 = vld [vmem:[#allocation5 + $0x138] sm:$0xff]
    %v101 = vld [vmem:[#allocation5 + $0x140] sm:$0xff]
    %v102 = vld [vmem:[#allocation5 + $0x148] sm:$0xff]
    %v103 = vld [vmem:[#allocation5 + $0x150] sm:$0xff]
    %v104 = vld [vmem:[#allocation5 + $0x158] sm:$0xff]
    %v105 = vld [vmem:[#allocation5 + $0x160] sm:$0xff]
    %v106 = vld [vmem:[#allocation5 + $0x168] sm:$0xff]
    %v107 = vld [vmem:[#allocation5 + $0x170] sm:$0xff]
    %v108 = vld [vmem:[#allocation5 + $0x178] sm:$0xff]
    %v109 = vld [vmem:[#allocation5 + $0x180] sm:$0xff]
    %v110 = vld [vmem:[#allocation5 + $0x188] sm:$0xff]
    %v111 = vld [vmem:[#allocation5 + $0x190] sm:$0xff]
    %v112 = vld [vmem:[#allocation5 + $0x198] sm:$0xff]
    %v113 = vld [vmem:[#allocation5 + $0x1a0] sm:$0xff]
    %v114 = vld [vmem:[#allocation5 + $0x1a8] sm:$0xff]
    %v115 = vld [vmem:[#allocation5 + $0x1b0] sm:$0xff]
    %v116 = vld [vmem:[#allocation5 + $0x1b8] sm:$0xff]
    %v117 = vld [vmem:[#allocation5 + $0x1c0] sm:$0xff]
    %v118 = vld [vmem:[#allocation5 + $0x1c8] sm:$0xff]
    %v119 = vld [vmem:[#allocation5 + $0x1d0] sm:$0xff]
    %v120 = vld [vmem:[#allocation5 + $0x1d8] sm:$0xff]
    %v121 = vld [vmem:[#allocation5 + $0x1e0] sm:$0xff]
    %v122 = vld [vmem:[#allocation5 + $0x1e8] sm:$0xff]
    %v123 = vld [vmem:[#allocation5 + $0x1f0] sm:$0xff]
    %v124 = vld [vmem:[#allocation5 + $0x1f8] sm:$0xff]
    %v125 = vld [vmem:[#allocation5 + $0x200] sm:$0xff]
    %v126 = vld [vmem:[#allocation5 + $0x208] sm:$0xff]
    %v127 = vld [vmem:[#allocation5 + $0x210] sm:$0xff]
    %v128 = vld [vmem:[#allocation5 + $0x218] sm:$0xff]
    %v129 = vld [vmem:[#allocation5 + $0x220] sm:$0xff]
    %v130 = vld [vmem:[#allocation5 + $0x228] sm:$0xff]
    %v131 = vld [vmem:[#allocation5 + $0x230] sm:$0xff]
    %v132 = vld [vmem:[#allocation5 + $0x238] sm:$0xff]
    %v133 = vld [vmem:[#allocation5 + $0x240] sm:$0xff]
    %v134 = vld [vmem:[#allocation5 + $0x248] sm:$0xff]
    %v135 = vld [vmem:[#allocation5 + $0x250] sm:$0xff]
    %v136 = vld [vmem:[#allocation5 + $0x258] sm:$0xff]
    %v137 = vld [vmem:[#allocation5 + $0x260] sm:$0xff]
    %v138 = vld [vmem:[#allocation5 + $0x268] sm:$0xff]
    %v139 = vld [vmem:[#allocation5 + $0x270] sm:$0xff]
    %v140 = vld [vmem:[#allocation5 + $0x278] sm:$0xff]
    %v141 = vld [vmem:[#allocation5 + $0x280] sm:$0xff]
    %v142 = vld [vmem:[#allocation5 + $0x288] sm:$0xff]
    %v143 = vld [vmem:[#allocation5 + $0x290] sm:$0xff]
    %v144 = vld [vmem:[#allocation5 + $0x298] sm:$0xff]
    %v145 = vld [vmem:[#allocation5 + $0x2a0] sm:$0xff]
    %v146 = vld [vmem:[#allocation5 + $0x2a8] sm:$0xff]
    %v147 = vld [vmem:[#allocation5 + $0x2b0] sm:$0xff]
    %v148 = vld [vmem:[#allocation5 + $0x2b8] sm:$0xff]
    %v149 = vld [vmem:[#allocation5 + $0x2c0] sm:$0xff]
    %v150 = vld [vmem:[#allocation5 + $0x2c8] sm:$0xff]
    %v151 = vld [vmem:[#allocation5 + $0x2d0] sm:$0xff]
    %v152 = vld [vmem:[#allocation5 + $0x2d8] sm:$0xff]
    %v153 = vld [vmem:[#allocation5 + $0x2e0] sm:$0xff]
    %v154 = vld [vmem:[#allocation5 + $0x2e8] sm:$0xff]
    %v155 = vld [vmem:[#allocation5 + $0x2f0] sm:$0xff]
    %v156 = vld [vmem:[#allocation5 + $0x2f8] sm:$0xff]
    %v157 = vld [vmem:[#allocation5 + $0x300] sm:$0xff]
    %v158 = vld [vmem:[#allocation5 + $0x308] sm:$0xff]
    %v159 = vld [vmem:[#allocation5 + $0x310] sm:$0xff]
    %v160 = vld [vmem:[#allocation5 + $0x318] sm:$0xff]
    %v161 = vld [vmem:[#allocation5 + $0x320] sm:$0xff]
    %v162 = vld [vmem:[#allocation5 + $0x328] sm:$0xff]
    %v163 = vld [vmem:[#allocation5 + $0x330] sm:$0xff]
    %v164 = vld [vmem:[#allocation5 + $0x338] sm:$0xff]
    %v165 = vld [vmem:[#allocation5 + $0x340] sm:$0xff]
    %v166 = vld [vmem:[#allocation5 + $0x348] sm:$0xff]
    %v167 = vld [vmem:[#allocation5 + $0x350] sm:$0xff]
    %v168 = vld [vmem:[#allocation5 + $0x358] sm:$0xff]
    %v169 = vld [vmem:[#allocation5 + $0x360] sm:$0xff]
    %v170 = vld [vmem:[#allocation5 + $0x368] sm:$0xff]
    %v171 = vld [vmem:[#allocation5 + $0x370] sm:$0xff]
    %v172 = vld [vmem:[#allocation5 + $0x378] sm:$0xff]
    %173 = vmatprep.subr.mxu0 0.0
    %174 = vmatpush1.msra.mxu0 %v76
    %175 = vmatprep.subr.mxu0 0.0
    %176 = vmatpush1.msra.mxu0 %v75
    %177 = vmatprep.subr.mxu0 0.0
    %178 = vmatpush1.msra.mxu0 %v74
    %179 = vmatprep.subr.mxu0 0.0
    %180 = vmatpush1.msra.mxu0 %v73
    %181 = vmatprep.subr.mxu0 0.0
    %182 = vmatpush1.msra.mxu0 %v72
    %183 = vmatprep.subr.mxu0 0.0
    %184 = vmatpush1.msra.mxu0 %v71
    %185 = vmatprep.subr.mxu0 0.0
    %186 = vmatpush1.msra.mxu0 %v70
    %187 = vmatprep.subr.mxu0 0.0
    %188 = vmatpush1.msra.mxu0 %v69
    %189 = vmatprep.subr.mxu0 0.0
    %190 = vmatpush1.msra.mxu0 %v68
    %191 = vmatprep.subr.mxu0 0.0
    %192 = vmatpush1.msra.mxu0 %v67
    %193 = vmatprep.subr.mxu0 0.0
    %194 = vmatpush1.msra.mxu0 %v66
    %195 = vmatprep.subr.mxu0 0.0
    %196 = vmatpush1.msra.mxu0 %v65
    %197 = vmatprep.subr.mxu0 0.0
    %198 = vmatpush1.msra.mxu0 %v64
    %199 = vmatprep.subr.mxu0 0.0
    %200 = vmatpush1.msra.mxu0 %v63
    %201 = vmatprep.subr.mxu0 0.0
    %202 = vmatpush1.msra.mxu0 %v62
    %203 = vmatprep.subr.mxu0 0.0
    %204 = vmatpush1.msra.mxu0 %v61
    %205 = vmatprep.subr.mxu0 0.0
    %206 = vmatpush2.msra.mxu0 %v92
    %207 = vmatprep.subr.mxu0 0.0
    %208 = vmatpush2.msra.mxu0 %v91
    %209 = vmatprep.subr.mxu0 0.0
    %210 = vmatpush2.msra.mxu0 %v90
    %211 = vmatprep.subr.mxu0 0.0
    %212 = vmatpush2.msra.mxu0 %v89
    %213 = vmatprep.subr.mxu0 0.0
    %214 = vmatpush2.msra.mxu0 %v88
    %215 = vmatprep.subr.mxu0 0.0
    %216 = vmatpush2.msra.mxu0 %v87
    %217 = vmatprep.subr.mxu0 0.0
    %218 = vmatpush2.msra.mxu0 %v86
    %219 = vmatprep.subr.mxu0 0.0
    %220 = vmatpush2.msra.mxu0 %v85
    %221 = vmatprep.subr.mxu0 0.0
    %222 = vmatpush2.msra.mxu0 %v84
    %223 = vmatprep.subr.mxu0 0.0
    %224 = vmatpush2.msra.mxu0 %v83
    %225 = vmatprep.subr.mxu0 0.0
    %226 = vmatpush2.msra.mxu0 %v82
    %227 = vmatprep.subr.mxu0 0.0
    %228 = vmatpush2.msra.mxu0 %v81
    %229 = vmatprep.subr.mxu0 0.0
    %230 = vmatpush2.msra.mxu0 %v80
    %231 = vmatprep.subr.mxu0 0.0
    %232 = vmatpush2.msra.mxu0 %v79
    %233 = vmatprep.subr.mxu0 0.0
    %234 = vmatpush2.msra.mxu0 %v78
    %235 = vmatprep.subr.mxu0 0.0
    %236 = vmatpush2.msra.mxu0 %v77
    %237 = vmatprep.mubr.f32.mxu0 %v55
    %238 = vmatmul.mubr.f32.gmra.mxu0 %v54
    %v239 = vpop.f32.mrf.mxu0
    %v240 = vadd.f32 0.0, %v239
    %v241 = vpop.f32.mrf.mxu0
    %242 = vdwg.mxu0
    %243 = vmatprep.subr.mxu0 0.0
    %244 = vmatpush1.msra.mxu0 %v108
    %245 = vmatprep.subr.mxu0 0.0
    %246 = vmatpush1.msra.mxu0 %v107
    %247 = vmatprep.subr.mxu0 0.0
    %248 = vmatpush1.msra.mxu0 %v106
    %249 = vmatprep.subr.mxu0 0.0
    %250 = vmatpush1.msra.mxu0 %v105
    %251 = vmatprep.subr.mxu0 0.0
    %252 = vmatpush1.msra.mxu0 %v104
    %253 = vmatprep.subr.mxu0 0.0
    %254 = vmatpush1.msra.mxu0 %v103
    %255 = vmatprep.subr.mxu0 0.0
    %256 = vmatpush1.msra.mxu0 %v102
    %257 = vmatprep.subr.mxu0 0.0
    %258 = vmatpush1.msra.mxu0 %v101
    %259 = vmatprep.subr.mxu0 0.0
    %260 = vmatpush1.msra.mxu0 %v100
    %261 = vmatprep.subr.mxu0 0.0
    %262 = vmatpush1.msra.mxu0 %v99
    %263 = vmatprep.subr.mxu0 0.0
    %264 = vmatpush1.msra.mxu0 %v98
    %265 = vmatprep.subr.mxu0 0.0
    %266 = vmatpush1.msra.mxu0 %v97
    %267 = vmatprep.subr.mxu0 0.0
    %268 = vmatpush1.msra.mxu0 %v96
    %269 = vmatprep.subr.mxu0 0.0
    %270 = vmatpush1.msra.mxu0 %v95
    %271 = vmatprep.subr.mxu0 0.0
    %272 = vmatpush1.msra.mxu0 %v94
    %273 = vmatprep.subr.mxu0 0.0
    %274 = vmatpush1.msra.mxu0 %v93
    %275 = vmatprep.subr.mxu0 0.0
    %276 = vmatpush2.msra.mxu0 %v124
    %277 = vmatprep.subr.mxu0 0.0
    %278 = vmatpush2.msra.mxu0 %v123
    %279 = vmatprep.subr.mxu0 0.0
    %280 = vmatpush2.msra.mxu0 %v122
    %281 = vmatprep.subr.mxu0 0.0
    %282 = vmatpush2.msra.mxu0 %v121
    %283 = vmatprep.subr.mxu0 0.0
    %284 = vmatpush2.msra.mxu0 %v120
    %285 = vmatprep.subr.mxu0 0.0
    %286 = vmatpush2.msra.mxu0 %v119
    %287 = vmatprep.subr.mxu0 0.0
    %288 = vmatpush2.msra.mxu0 %v118
    %289 = vmatprep.subr.mxu0 0.0
    %290 = vmatpush2.msra.mxu0 %v117
    %291 = vmatprep.subr.mxu0 0.0
    %292 = vmatpush2.msra.mxu0 %v116
    %293 = vmatprep.subr.mxu0 0.0
    %294 = vmatpush2.msra.mxu0 %v115
    %295 = vmatprep.subr.mxu0 0.0
    %296 = vmatpush2.msra.mxu0 %v114
    %297 = vmatprep.subr.mxu0 0.0
    %298 = vmatpush2.msra.mxu0 %v113
    %299 = vmatprep.subr.mxu0 0.0
    %300 = vmatpush2.msra.mxu0 %v112
    %301 = vmatprep.subr.mxu0 0.0
    %302 = vmatpush2.msra.mxu0 %v111
    %303 = vmatprep.subr.mxu0 0.0
    %304 = vmatpush2.msra.mxu0 %v110
    %305 = vmatprep.subr.mxu0 0.0
    %306 = vmatpush2.msra.mxu0 %v109
    %307 = vmatprep.mubr.f32.mxu0 %v57
    %308 = vmatmul.mubr.f32.gmra.mxu0 %v56
    %v309 = vpop.f32.mrf.mxu0
    %v310 = vadd.f32 %v240, %v309
    %v311 = vpop.f32.mrf.mxu0
    %312 = vdwg.mxu0
    %313 = vmatprep.subr.mxu0 0.0
    %314 = vmatpush1.msra.mxu0 %v140
    %315 = vmatprep.subr.mxu0 0.0
    %316 = vmatpush1.msra.mxu0 %v139
    %317 = vmatprep.subr.mxu0 0.0
    %318 = vmatpush1.msra.mxu0 %v138
    %319 = vmatprep.subr.mxu0 0.0
    %320 = vmatpush1.msra.mxu0 %v137
    %321 = vmatprep.subr.mxu0 0.0
    %322 = vmatpush1.msra.mxu0 %v136
    %323 = vmatprep.subr.mxu0 0.0
    %324 = vmatpush1.msra.mxu0 %v135
    %325 = vmatprep.subr.mxu0 0.0
    %326 = vmatpush1.msra.mxu0 %v134
    %327 = vmatprep.subr.mxu0 0.0
    %328 = vmatpush1.msra.mxu0 %v133
    %329 = vmatprep.subr.mxu0 0.0
    %330 = vmatpush1.msra.mxu0 %v132
    %331 = vmatprep.subr.mxu0 0.0
    %332 = vmatpush1.msra.mxu0 %v131
    %333 = vmatprep.subr.mxu0 0.0
    %334 = vmatpush1.msra.mxu0 %v130
    %335 = vmatprep.subr.mxu0 0.0
    %336 = vmatpush1.msra.mxu0 %v129
    %337 = vmatprep.subr.mxu0 0.0
    %338 = vmatpush1.msra.mxu0 %v128
    %339 = vmatprep.subr.mxu0 0.0
    %340 = vmatpush1.msra.mxu0 %v127
    %341 = vmatprep.subr.mxu0 0.0
    %342 = vmatpush1.msra.mxu0 %v126
    %343 = vmatprep.subr.mxu0 0.0
    %344 = vmatpush1.msra.mxu0 %v125
    %345 = vmatprep.subr.mxu0 0.0
    %346 = vmatpush2.msra.mxu0 %v156
    %347 = vmatprep.subr.mxu0 0.0
    %348 = vmatpush2.msra.mxu0 %v155
    %349 = vmatprep.subr.mxu0 0.0
    %350 = vmatpush2.msra.mxu0 %v154
    %351 = vmatprep.subr.mxu0 0.0
    %352 = vmatpush2.msra.mxu0 %v153
    %353 = vmatprep.subr.mxu0 0.0
    %354 = vmatpush2.msra.mxu0 %v152
    %355 = vmatprep.subr.mxu0 0.0
    %356 = vmatpush2.msra.mxu0 %v151
    %357 = vmatprep.subr.mxu0 0.0
    %358 = vmatpush2.msra.mxu0 %v150
    %359 = vmatprep.subr.mxu0 0.0
    %360 = vmatpush2.msra.mxu0 %v149
    %361 = vmatprep.subr.mxu0 0.0
    %362 = vmatpush2.msra.mxu0 %v148
    %363 = vmatprep.subr.mxu0 0.0
    %364 = vmatpush2.msra.mxu0 %v147
    %365 = vmatprep.subr.mxu0 0.0
    %366 = vmatpush2.msra.mxu0 %v146
    %367 = vmatprep.subr.mxu0 0.0
    %368 = vmatpush2.msra.mxu0 %v145
    %369 = vmatprep.subr.mxu0 0.0
    %370 = vmatpush2.msra.mxu0 %v144
    %371 = vmatprep.subr.mxu0 0.0
    %372 = vmatpush2.msra.mxu0 %v143
    %373 = vmatprep.subr.mxu0 0.0
    %374 = vmatpush2.msra.mxu0 %v142
    %375 = vmatprep.subr.mxu0 0.0
    %376 = vmatpush2.msra.mxu0 %v141
    %377 = vmatprep.mubr.f32.mxu0 %v59
    %378 = vmatmul.mubr.f32.gmra.mxu0 %v58
    %v379 = vpop.f32.mrf.mxu0
    %v380 = vadd.f32 %v310, %v379
    %v381 = vpop.f32.mrf.mxu0
    %382 = vdwg.mxu0
    %383 = vmatprep.subr.mxu0 0.0
    %384 = vmatpush1.msra.mxu0 %v172
    %385 = vmatprep.subr.mxu0 0.0
    %386 = vmatpush1.msra.mxu0 %v171
    %387 = vmatprep.subr.mxu0 0.0
    %388 = vmatpush1.msra.mxu0 %v170
    %389 = vmatprep.subr.mxu0 0.0
    %390 = vmatpush1.msra.mxu0 %v169
    %391 = vmatprep.subr.mxu0 0.0
    %392 = vmatpush1.msra.mxu0 %v168
    %393 = vmatprep.subr.mxu0 0.0
    %394 = vmatpush1.msra.mxu0 %v167
    %395 = vmatprep.subr.mxu0 0.0
    %396 = vmatpush1.msra.mxu0 %v166
    %397 = vmatprep.subr.mxu0 0.0
    %398 = vmatpush1.msra.mxu0 %v165
    %399 = vmatprep.subr.mxu0 0.0
    %400 = vmatpush1.msra.mxu0 %v164
    %401 = vmatprep.subr.mxu0 0.0
    %402 = vmatpush1.msra.mxu0 %v163
    %403 = vmatprep.subr.mxu0 0.0
    %404 = vmatpush1.msra.mxu0 %v162
    %405 = vmatprep.subr.mxu0 0.0
    %406 = vmatpush1.msra.mxu0 %v161
    %407 = vmatprep.subr.mxu0 0.0
    %408 = vmatpush1.msra.mxu0 %v160
    %409 = vmatprep.subr.mxu0 0.0
    %410 = vmatpush1.msra.mxu0 %v159
    %411 = vmatprep.subr.mxu0 0.0
    %412 = vmatpush1.msra.mxu0 %v158
    %413 = vmatprep.subr.mxu0 0.0
    %414 = vmatpush1.msra.mxu0 %v157
    %415 = vmatprep.subr.mxu0 0.0
    %416 = vmatpush2.msra.mxu0 0.0
    %417 = vmatprep.subr.mxu0 0.0
    %418 = vmatpush2.msra.mxu0 0.0
    %419 = vmatprep.subr.mxu0 0.0
    %420 = vmatpush2.msra.mxu0 0.0
    %421 = vmatprep.subr.mxu0 0.0
    %422 = vmatpush2.msra.mxu0 0.0
    %423 = vmatprep.subr.mxu0 0.0
    %424 = vmatpush2.msra.mxu0 0.0
    %425 = vmatprep.subr.mxu0 0.0
    %426 = vmatpush2.msra.mxu0 0.0
    %427 = vmatprep.subr.mxu0 0.0
    %428 = vmatpush2.msra.mxu0 0.0
    %429 = vmatprep.subr.mxu0 0.0
    %430 = vmatpush2.msra.mxu0 0.0
    %431 = vmatprep.subr.mxu0 0.0
    %432 = vmatpush2.msra.mxu0 0.0
    %433 = vmatprep.subr.mxu0 0.0
    %434 = vmatpush2.msra.mxu0 0.0
    %435 = vmatprep.subr.mxu0 0.0
    %436 = vmatpush2.msra.mxu0 0.0
    %437 = vmatprep.subr.mxu0 0.0
    %438 = vmatpush2.msra.mxu0 0.0
    %439 = vmatprep.subr.mxu0 0.0
    %440 = vmatpush2.msra.mxu0 0.0
    %441 = vmatprep.subr.mxu0 0.0
    %442 = vmatpush2.msra.mxu0 0.0
    %443 = vmatprep.subr.mxu0 0.0
    %444 = vmatpush2.msra.mxu0 0.0
    %445 = vmatprep.subr.mxu0 0.0
    %446 = vmatpush2.msra.mxu0 0.0
    %447 = vmatprep.mubr.f32.mxu0 0.0
    %448 = vmatmul.mubr.f32.gmra.mxu0 %v60
    %v449 = vpop.f32.mrf.mxu0
    %v450 = vadd.f32 %v380, %v449
    %v451 = vpop.f32.mrf.mxu0
    %452 = vdwg.mxu0
    %v453 = vmax.f32 %v450, 0.0
    %v454 = vld [vmem:[#allocation7] sm:$0xff]
    %v455 = vld [vmem:[#allocation7 + $0x8] sm:$0xff]
    %v456 = vld [vmem:[#allocation7 + $0x10] sm:$0xff]
    %v457 = vld [vmem:[#allocation7 + $0x18] sm:$0xff]
    %v458 = vld [vmem:[#allocation7 + $0x20] sm:$0xff]
    %v459 = vld [vmem:[#allocation7 + $0x28] sm:$0xff]
    %v460 = vld [vmem:[#allocation7 + $0x30] sm:$0xff]
    %v461 = vld [vmem:[#allocation7 + $0x38] sm:$0xff]
    %v462 = vld [vmem:[#allocation7 + $0x40] sm:$0xff]
    %v463 = vld [vmem:[#allocation7 + $0x48] sm:$0xff]
    %v464 = vld [vmem:[#allocation7 + $0x50] sm:$0xff]
    %v465 = vld [vmem:[#allocation7 + $0x58] sm:$0xff]
    %v466 = vld [vmem:[#allocation7 + $0x60] sm:$0xff]
    %v467 = vld [vmem:[#allocation7 + $0x68] sm:$0xff]
    %v468 = vld [vmem:[#allocation7 + $0x70] sm:$0xff]
    %v469 = vld [vmem:[#allocation7 + $0x78] sm:$0xff]
    %470 = vmatprep.subr.mxu0 0.0
    %471 = vmatpush1.msra.mxu0 %v469
    %472 = vmatprep.subr.mxu0 0.0
    %473 = vmatpush1.msra.mxu0 %v468
    %474 = vmatprep.subr.mxu0 0.0
    %475 = vmatpush1.msra.mxu0 %v467
    %476 = vmatprep.subr.mxu0 0.0
    %477 = vmatpush1.msra.mxu0 %v466
    %478 = vmatprep.subr.mxu0 0.0
    %479 = vmatpush1.msra.mxu0 %v465
    %480 = vmatprep.subr.mxu0 0.0
    %481 = vmatpush1.msra.mxu0 %v464
    %482 = vmatprep.subr.mxu0 0.0
    %483 = vmatpush1.msra.mxu0 %v463
    %484 = vmatprep.subr.mxu0 0.0
    %485 = vmatpush1.msra.mxu0 %v462
    %486 = vmatprep.subr.mxu0 0.0
    %487 = vmatpush1.msra.mxu0 %v461
    %488 = vmatprep.subr.mxu0 0.0
    %489 = vmatpush1.msra.mxu0 %v460
    %490 = vmatprep.subr.mxu0 0.0
    %491 = vmatpush1.msra.mxu0 %v459
    %492 = vmatprep.subr.mxu0 0.0
    %493 = vmatpush1.msra.mxu0 %v458
    %494 = vmatprep.subr.mxu0 0.0
    %495 = vmatpush1.msra.mxu0 %v457
    %496 = vmatprep.subr.mxu0 0.0
    %497 = vmatpush1.msra.mxu0 %v456
    %498 = vmatprep.subr.mxu0 0.0
    %499 = vmatpush1.msra.mxu0 %v455
    %500 = vmatprep.subr.mxu0 0.0
    %501 = vmatpush1.msra.mxu0 %v454
    %502 = vmatprep.subr.mxu0 0.0
    %503 = vmatpush2.msra.mxu0 0.0
    %504 = vmatprep.subr.mxu0 0.0
    %505 = vmatpush2.msra.mxu0 0.0
    %506 = vmatprep.subr.mxu0 0.0
    %507 = vmatpush2.msra.mxu0 0.0
    %508 = vmatprep.subr.mxu0 0.0
    %509 = vmatpush2.msra.mxu0 0.0
    %510 = vmatprep.subr.mxu0 0.0
    %511 = vmatpush2.msra.mxu0 0.0
    %512 = vmatprep.subr.mxu0 0.0
    %513 = vmatpush2.msra.mxu0 0.0
    %514 = vmatprep.subr.mxu0 0.0
    %515 = vmatpush2.msra.mxu0 0.0
    %516 = vmatprep.subr.mxu0 0.0
    %517 = vmatpush2.msra.mxu0 0.0
    %518 = vmatprep.subr.mxu0 0.0
    %519 = vmatpush2.msra.mxu0 0.0
    %520 = vmatprep.subr.mxu0 0.0
    %521 = vmatpush2.msra.mxu0 0.0
    %522 = vmatprep.subr.mxu0 0.0
    %523 = vmatpush2.msra.mxu0 0.0
    %524 = vmatprep.subr.mxu0 0.0
    %525 = vmatpush2.msra.mxu0 0.0
    %526 = vmatprep.subr.mxu0 0.0
    %527 = vmatpush2.msra.mxu0 0.0
    %528 = vmatprep.subr.mxu0 0.0
    %529 = vmatpush2.msra.mxu0 0.0
    %530 = vmatprep.subr.mxu0 0.0
    %531 = vmatpush2.msra.mxu0 0.0
    %532 = vmatprep.subr.mxu0 0.0
    %533 = vmatpush2.msra.mxu0 0.0
    %534 = vmatprep.mubr.f32.mxu0 0.0
    %535 = vmatmul.mubr.f32.gmra.mxu0 %v453
    %v536 = vpop.f32.mrf.mxu0
    %v537 = vadd.f32 0.0, %v536
    %v538 = vpop.f32.mrf.mxu0
    %539 = vdwg.mxu0
    %540 = vst [vmem:[#allocation8] sm:$0xff] %v537
    // Predicated region
    $region26: #{tpu_custom_call.1} parent=1 // pred_check
      _
    $region27: #{tpu_custom_call.1} parent=1 // pred_check_branch
      %542 = sbr.rel (0) target = $region29
    $region28: #{tpu_custom_call.1} parent=1 // pred_region
      %s544 = ssub.s32 128, 128
      %545 = vsyncadd [#allocation4], %s544
      %s547 = sshll.u32 [#allocation8], 4
      %s548 = int_to_ptr.vmem [resolvable:$true] %s547
      %550 = dma.vmem_to_hbm [thread:$0]  %s548, 128, %s3, [#allocation4]
    $region29: #{tpu_custom_call.1} parent=1 // pred_fallthru
      _
    // Predicated region
    $region30: #{tpu_custom_call.1} parent=1 // pred_check
      _
    $region31: #{tpu_custom_call.1} parent=1 // pred_check_branch
      %552 = sbr.rel (0) target = $region33
    $region32: #{tpu_custom_call.1} parent=1 // pred_region
      %553 = dma.done [#allocation4], 128
    $region33: #{tpu_custom_call.1} parent=1 // pred_fallthru
      _
    %554 = vsyncpa [#allocation3], 1
    %555 = vsyncpa [#allocation6], 1
    %556 = vsyncpa [#allocation4], 1

</llo_original>
